<compile_context>
chip_gen: v5e
topology: v5e:2x2
jax: 0.10.0
libtpu: 0.0.40
codegen_flags: <defaults>
</compile_context>

<pallas_src>
import functools
import math

import jax
import jax.numpy as jnp
from jax.experimental import pallas as pl
from jax.experimental.pallas import tpu as pltpu

_LANE = 128  # TPU vreg lane width


def _round_up(x, m):
    return ((x + m - 1) // m) * m


def _mlp_softmax_kernel(x_ref,
                        w1_ref, b1_ref,
                        w2_ref, b2_ref,
                        w3_ref, b3_ref,
                        w4_ref, b4_ref,
                        out_ref):
    """Fused 4-layer MLP + softmax over the (lane-padded) class dim for one batch tile.

    Matmuls run with bf16 operands and f32 accumulation; bias-add / ReLU / softmax in f32.
    """
    # In-kernel cast: x stays f32 in HBM; the cast is a cheap VPU op on the VMEM tile.
    h = x_ref[...].astype(jnp.bfloat16)

    # hidden layers: Linear + ReLU (accumulate f32, re-narrow to bf16 for the next MXU pass)
    h = jnp.dot(h, w1_ref[...], preferred_element_type=jnp.float32) + b1_ref[...]
    h = jnp.maximum(h, 0.0).astype(jnp.bfloat16)
    h = jnp.dot(h, w2_ref[...], preferred_element_type=jnp.float32) + b2_ref[...]
    h = jnp.maximum(h, 0.0).astype(jnp.bfloat16)
    h = jnp.dot(h, w3_ref[...], preferred_element_type=jnp.float32) + b3_ref[...]
    h = jnp.maximum(h, 0.0).astype(jnp.bfloat16)

    # output layer (logits over padded classes; pad columns carry bias -1e30)
    logits = jnp.dot(h, w4_ref[...], preferred_element_type=jnp.float32) + b4_ref[...]

    # numerically stable softmax over the lane axis (pad classes underflow to exactly 0)
    m = jnp.max(logits, axis=-1, keepdims=True)
    e = jnp.exp(logits - m)
    denom = jnp.sum(e, axis=-1, keepdims=True)
    # EUP approx reciprocal + one Newton step: effectively exact, keeps the divide off the VALU.
    r = pl.reciprocal(denom, approx=True)
    r = r * (2.0 - denom * r)
    out_ref[...] = (e * r).astype(out_ref.dtype)


def _pick_batch_tile(B):
    """Batch-tile heuristic (see performance notes at top of file)."""
    if B <= 64:
        return B                                   # single grid step
    if B <= 512:
        # >= 2 parallel blocks so v7x's two TensorCores both get work
        return min(_round_up(pl.cdiv(B, 2), 16), B)
    return 512                                     # large B: amortize per-step overhead


def nn_classifier_forward(x, packed_params, *, n_classes, batch_tile=None,
                          out_dtype=jnp.bfloat16, return_padded=False):
    """packed_params = [(w1,b1),...,(w4,b4)], w: bf16 [in,out], b: f32 [1,out];
    last layer padded to a multiple of 128 output columns.

    Returns softmax probabilities [B, n_classes] (or the lane-padded [B, n_pad] array if
    return_padded=True, letting a fused downstream consumer skip the slice)."""
    (w1, b1), (w2, b2), (w3, b3), (w4, b4) = packed_params
    B, D = x.shape
    n_out_padded = w4.shape[1]

    tb = _pick_batch_tile(B) if batch_tile is None else min(batch_tile, B)
    grid = (pl.cdiv(B, tb),)

    def x_map(i):
        return (i, 0)

    def const_map(i):
        return (0, 0)

    full = lambda a: pl.BlockSpec(a.shape, const_map)
    # TODO(synk): for hidden widths beyond ~1-2k, give the constant weight/bias specs
    # pipeline_mode=pl.Buffered(1), set vmem_limit_bytes explicitly, or tile weights over a
    # K/N "arbitrary" reduction axis with an f32 accumulator (v7x has only 64 MiB VMEM).

    out_padded = pl.pallas_call(
        _mlp_softmax_kernel,
        out_shape=jax.ShapeDtypeStruct((B, n_out_padded), out_dtype),
        grid_spec=pltpu.PrefetchScalarGridSpec(
            num_scalar_prefetch=0,
            grid=grid,
            in_specs=[
                pl.BlockSpec((tb, D), x_map),
                full(w1), full(b1),
                full(w2), full(b2),
                full(w3), full(b3),
                full(w4), full(b4),
            ],
            out_specs=pl.BlockSpec((tb, n_out_padded), x_map),
        ),
        compiler_params=pltpu.CompilerParams(
            dimension_semantics=("parallel",)),
    )(x, w1, b1, w2, b2, w3, b3, w4, b4)

    if return_padded:
        return out_padded
    # drop the pad classes (their probabilities are exactly 0)
    return out_padded[:, :n_classes]


def init_params(key, input_dim, layer_sizes, n_classes):
    """Xavier-uniform weights, zero biases (matches init_model). f32, w: [in, out], b: [out]."""
    dims = (input_dim,) + tuple(layer_sizes) + (n_classes,)
    params = []
    for fan_in, fan_out in zip(dims[:-1], dims[1:]):
        key, sub = jax.random.split(key)
        bound = math.sqrt(6.0 / (fan_in + fan_out))
        w = jax.random.uniform(sub, (fan_in, fan_out), jnp.float32,
                               minval=-bound, maxval=bound)
        b = jnp.zeros((fan_out,), jnp.float32)
        params.append((w, b))
    return params


def pack_params(params):
    """bf16 weights, f32 [1,out] biases; pad the last layer to a multiple of 128 output
    columns with zero weights and -1e30 biases (pad classes -> softmax prob 0)."""
    packed = []
    n_layers = len(params)
    for i, (w, b) in enumerate(params):
        w = jnp.asarray(w, jnp.float32)
        b = jnp.asarray(b, jnp.float32).reshape(1, -1)
        if i == n_layers - 1:
            pad = (-w.shape[1]) % _LANE
            if pad:
                w = jnp.pad(w, ((0, 0), (0, pad)))
                b = jnp.pad(b, ((0, 0), (0, pad)), constant_values=-1e30)
        packed.append((w.astype(jnp.bfloat16), b))
    return packed


def _reference_forward(x, params):
    """Pure-JAX f32 reference matching the PyTorch module's forward."""
    h = x
    for w, b in params[:-1]:
        h = jnp.maximum(h @ w + b.reshape(1, -1), 0.0)
    w, b = params[-1]
    logits = h @ w + b.reshape(1, -1)
    return jax.nn.softmax(logits, axis=-1)


if __name__ == "__main__":
    # Small, module-consistent shapes: input_dim=32, layer_sizes=(128,128,128), n_classes=8.
    input_dim = 32
    layer_sizes = (128, 128, 128)
    n_classes = 8

    key = jax.random.PRNGKey(0)
    params = init_params(key, input_dim, layer_sizes, n_classes)
    packed = pack_params(params)

    fwd = jax.jit(functools.partial(nn_classifier_forward, n_classes=n_classes))

    # --- small batch: single grid step path ---
    key, xk = jax.random.split(key)
    x = jax.random.normal(xk, (16, input_dim), jnp.float32)
    probs = fwd(x, packed)
    jax.block_until_ready(probs)
    probs_f32 = probs.astype(jnp.float32)
    assert probs.shape == (16, n_classes)
    assert bool(jnp.allclose(jnp.sum(probs_f32, axis=-1), 1.0, atol=2e-2))  # bf16 output
    ref = _reference_forward(x, params)
    assert bool(jnp.allclose(probs_f32, ref, atol=8e-2))

    # --- mid-size batch: >=2 parallel blocks + partial last block (B % tb != 0) ---
    key, xk = jax.random.split(key)
    x2 = jax.random.normal(xk, (300, input_dim), jnp.float32)
    probs2 = fwd(x2, packed)
    jax.block_until_ready(probs2)
    probs2_f32 = probs2.astype(jnp.float32)
    assert probs2.shape == (300, n_classes)
    assert bool(jnp.allclose(jnp.sum(probs2_f32, axis=-1), 1.0, atol=2e-2))
    ref2 = _reference_forward(x2, params)
    assert bool(jnp.allclose(probs2_f32, ref2, atol=8e-2))

    print("KERNEL_OK")
</pallas_src>

<mosaic_0001>
module attributes {stable_mosaic.version = 11 : i64} {
  func.func @_mlp_softmax_kernel(%arg0: i32, %arg1: memref<16x32xf32, #tpu.memory_space<vmem>>, %arg2: memref<32x128xbf16, #tpu.memory_space<vmem>>, %arg3: memref<1x128xf32, #tpu.memory_space<vmem>>, %arg4: memref<128x128xbf16, #tpu.memory_space<vmem>>, %arg5: memref<1x128xf32, #tpu.memory_space<vmem>>, %arg6: memref<128x128xbf16, #tpu.memory_space<vmem>>, %arg7: memref<1x128xf32, #tpu.memory_space<vmem>>, %arg8: memref<128x128xbf16, #tpu.memory_space<vmem>>, %arg9: memref<1x128xf32, #tpu.memory_space<vmem>>, %arg10: memref<16x128xbf16, #tpu.memory_space<vmem>>) attributes {dimension_semantics = [#tpu.dimension_semantics<parallel>], iteration_bounds = array<i64: 1>, scalar_prefetch = 0 : i64, scratch_operands = 0 : i64, tpu.core_type = #tpu.core_type<tc>, window_params = [{transform_indices = @transform_0, window_bounds = array<i64: 16, 32>}, {pipeline_mode = #tpu.pipeline_mode<synchronous>, transform_indices = @transform_1, window_bounds = array<i64: 32, 128>}, {pipeline_mode = #tpu.pipeline_mode<synchronous>, transform_indices = @transform_2, window_bounds = array<i64: 1, 128>}, {pipeline_mode = #tpu.pipeline_mode<synchronous>, transform_indices = @transform_3, window_bounds = array<i64: 128, 128>}, {pipeline_mode = #tpu.pipeline_mode<synchronous>, transform_indices = @transform_4, window_bounds = array<i64: 1, 128>}, {pipeline_mode = #tpu.pipeline_mode<synchronous>, transform_indices = @transform_5, window_bounds = array<i64: 128, 128>}, {pipeline_mode = #tpu.pipeline_mode<synchronous>, transform_indices = @transform_6, window_bounds = array<i64: 1, 128>}, {pipeline_mode = #tpu.pipeline_mode<synchronous>, transform_indices = @transform_7, window_bounds = array<i64: 128, 128>}, {pipeline_mode = #tpu.pipeline_mode<synchronous>, transform_indices = @transform_8, window_bounds = array<i64: 1, 128>}, {transform_indices = @transform_9, window_bounds = array<i64: 16, 128>}]} {
    %c0 = arith.constant 0 : index
    %c0_0 = arith.constant 0 : index
    %0 = vector.load %arg1[%c0, %c0_0] : memref<16x32xf32, #tpu.memory_space<vmem>>, vector<16x32xf32>
    %1 = arith.truncf %0 : vector<16x32xf32> to vector<16x32xbf16>
    %c0_1 = arith.constant 0 : index
    %c0_2 = arith.constant 0 : index
    %2 = vector.load %arg2[%c0_1, %c0_2] : memref<32x128xbf16, #tpu.memory_space<vmem>>, vector<32x128xbf16>
    %cst = arith.constant dense<0.000000e+00> : vector<16x128xf32>
    %3 = tpu.matmul %1, %2, %cst {dimension_numbers = #tpu.dot_dimension_numbers<[1], [0], [0], [1], [0, 0, 1, 1], [], []>} : vector<16x32xbf16>, vector<32x128xbf16>, vector<16x128xf32> -> vector<16x128xf32>
    %c0_3 = arith.constant 0 : index
    %c0_4 = arith.constant 0 : index
    %4 = vector.load %arg3[%c0_3, %c0_4] : memref<1x128xf32, #tpu.memory_space<vmem>>, vector<1x128xf32>
    %5 = vector.broadcast %4 : vector<1x128xf32> to vector<16x128xf32>
    %6 = arith.addf %3, %5 : vector<16x128xf32>
    %cst_5 = arith.constant 0.000000e+00 : f32
    %7 = vector.broadcast %cst_5 : f32 to vector<16x128xf32>
    %8 = arith.maximumf %6, %7 : vector<16x128xf32>
    %9 = arith.truncf %8 : vector<16x128xf32> to vector<16x128xbf16>
    %c0_6 = arith.constant 0 : index
    %c0_7 = arith.constant 0 : index
    %10 = vector.load %arg4[%c0_6, %c0_7] : memref<128x128xbf16, #tpu.memory_space<vmem>>, vector<128x128xbf16>
    %cst_8 = arith.constant dense<0.000000e+00> : vector<16x128xf32>
    %11 = tpu.matmul %9, %10, %cst_8 {dimension_numbers = #tpu.dot_dimension_numbers<[1], [0], [0], [1], [0, 0, 1, 1], [], []>} : vector<16x128xbf16>, vector<128x128xbf16>, vector<16x128xf32> -> vector<16x128xf32>
    %c0_9 = arith.constant 0 : index
    %c0_10 = arith.constant 0 : index
    %12 = vector.load %arg5[%c0_9, %c0_10] : memref<1x128xf32, #tpu.memory_space<vmem>>, vector<1x128xf32>
    %13 = vector.broadcast %12 : vector<1x128xf32> to vector<16x128xf32>
    %14 = arith.addf %11, %13 : vector<16x128xf32>
    %cst_11 = arith.constant 0.000000e+00 : f32
    %15 = vector.broadcast %cst_11 : f32 to vector<16x128xf32>
    %16 = arith.maximumf %14, %15 : vector<16x128xf32>
    %17 = arith.truncf %16 : vector<16x128xf32> to vector<16x128xbf16>
    %c0_12 = arith.constant 0 : index
    %c0_13 = arith.constant 0 : index
    %18 = vector.load %arg6[%c0_12, %c0_13] : memref<128x128xbf16, #tpu.memory_space<vmem>>, vector<128x128xbf16>
    %cst_14 = arith.constant dense<0.000000e+00> : vector<16x128xf32>
    %19 = tpu.matmul %17, %18, %cst_14 {dimension_numbers = #tpu.dot_dimension_numbers<[1], [0], [0], [1], [0, 0, 1, 1], [], []>} : vector<16x128xbf16>, vector<128x128xbf16>, vector<16x128xf32> -> vector<16x128xf32>
    %c0_15 = arith.constant 0 : index
    %c0_16 = arith.constant 0 : index
    %20 = vector.load %arg7[%c0_15, %c0_16] : memref<1x128xf32, #tpu.memory_space<vmem>>, vector<1x128xf32>
    %21 = vector.broadcast %20 : vector<1x128xf32> to vector<16x128xf32>
    %22 = arith.addf %19, %21 : vector<16x128xf32>
    %cst_17 = arith.constant 0.000000e+00 : f32
    %23 = vector.broadcast %cst_17 : f32 to vector<16x128xf32>
    %24 = arith.maximumf %22, %23 : vector<16x128xf32>
    %25 = arith.truncf %24 : vector<16x128xf32> to vector<16x128xbf16>
    %c0_18 = arith.constant 0 : index
    %c0_19 = arith.constant 0 : index
    %26 = vector.load %arg8[%c0_18, %c0_19] : memref<128x128xbf16, #tpu.memory_space<vmem>>, vector<128x128xbf16>
    %cst_20 = arith.constant dense<0.000000e+00> : vector<16x128xf32>
    %27 = tpu.matmul %25, %26, %cst_20 {dimension_numbers = #tpu.dot_dimension_numbers<[1], [0], [0], [1], [0, 0, 1, 1], [], []>} : vector<16x128xbf16>, vector<128x128xbf16>, vector<16x128xf32> -> vector<16x128xf32>
    %c0_21 = arith.constant 0 : index
    %c0_22 = arith.constant 0 : index
    %28 = vector.load %arg9[%c0_21, %c0_22] : memref<1x128xf32, #tpu.memory_space<vmem>>, vector<1x128xf32>
    %29 = vector.broadcast %28 : vector<1x128xf32> to vector<16x128xf32>
    %30 = arith.addf %27, %29 : vector<16x128xf32>
    %cst_23 = arith.constant dense<0xFF800000> : vector<16xf32>
    %31 = vector.multi_reduction <maximumf>, %30, %cst_23 [1] : vector<16x128xf32> to vector<16xf32>
    %32 = vector.shape_cast %31 : vector<16xf32> to vector<16x1xf32>
    %33 = vector.broadcast %32 : vector<16x1xf32> to vector<16x128xf32>
    %34 = arith.subf %30, %33 : vector<16x128xf32>
    %35 = math.exp %34 : vector<16x128xf32>
    %cst_24 = arith.constant dense<0.000000e+00> : vector<16xf32>
    %36 = vector.multi_reduction <add>, %35, %cst_24 [1] : vector<16x128xf32> to vector<16xf32>
    %37 = vector.shape_cast %36 : vector<16xf32> to vector<16x1xf32>
    %38 = tpu.reciprocal %37 {approx = true} : vector<16x1xf32> -> vector<16x1xf32>
    %39 = arith.mulf %37, %38 : vector<16x1xf32>
    %cst_25 = arith.constant 2.000000e+00 : f32
    %40 = vector.broadcast %cst_25 : f32 to vector<16x1xf32>
    %41 = arith.subf %40, %39 : vector<16x1xf32>
    %42 = arith.mulf %38, %41 : vector<16x1xf32>
    %43 = vector.broadcast %42 : vector<16x1xf32> to vector<16x128xf32>
    %44 = arith.mulf %35, %43 : vector<16x128xf32>
    %45 = arith.truncf %44 : vector<16x128xf32> to vector<16x128xbf16>
    %c0_26 = arith.constant 0 : index
    %c0_27 = arith.constant 0 : index
    %46 = vector.load %arg10[%c0_26, %c0_27] : memref<16x128xbf16, #tpu.memory_space<vmem>>, vector<16x128xbf16>
    tpu.vector_store %arg10[%c0_26, %c0_27], %45 {strides = array<i32>} : memref<16x128xbf16, #tpu.memory_space<vmem>>, vector<16x128xbf16>,
    return
  }
  func.func @transform_0(%arg0: i32) -> (i32, i32) {
    %c0_i32 = arith.constant 0 : i32
    %c0_i32_0 = arith.constant 0 : i32
    return %arg0, %c0_i32 : i32, i32
  }
  func.func @transform_1(%arg0: i32) -> (i32, i32) {
    %c0_i32 = arith.constant 0 : i32
    %c0_i32_0 = arith.constant 0 : i32
    %c0_i32_1 = arith.constant 0 : i32
    return %c0_i32, %c0_i32_0 : i32, i32
  }
  func.func @transform_2(%arg0: i32) -> (i32, i32) {
    %c0_i32 = arith.constant 0 : i32
    %c0_i32_0 = arith.constant 0 : i32
    %c0_i32_1 = arith.constant 0 : i32
    return %c0_i32, %c0_i32_0 : i32, i32
  }
  func.func @transform_3(%arg0: i32) -> (i32, i32) {
    %c0_i32 = arith.constant 0 : i32
    %c0_i32_0 = arith.constant 0 : i32
    %c0_i32_1 = arith.constant 0 : i32
    return %c0_i32, %c0_i32_0 : i32, i32
  }
  func.func @transform_4(%arg0: i32) -> (i32, i32) {
    %c0_i32 = arith.constant 0 : i32
    %c0_i32_0 = arith.constant 0 : i32
    %c0_i32_1 = arith.constant 0 : i32
    return %c0_i32, %c0_i32_0 : i32, i32
  }
  func.func @transform_5(%arg0: i32) -> (i32, i32) {
    %c0_i32 = arith.constant 0 : i32
    %c0_i32_0 = arith.constant 0 : i32
    %c0_i32_1 = arith.constant 0 : i32
    return %c0_i32, %c0_i32_0 : i32, i32
  }
  func.func @transform_6(%arg0: i32) -> (i32, i32) {
    %c0_i32 = arith.constant 0 : i32
    %c0_i32_0 = arith.constant 0 : i32
    %c0_i32_1 = arith.constant 0 : i32
    return %c0_i32, %c0_i32_0 : i32, i32
  }
  func.func @transform_7(%arg0: i32) -> (i32, i32) {
    %c0_i32 = arith.constant 0 : i32
    %c0_i32_0 = arith.constant 0 : i32
    %c0_i32_1 = arith.constant 0 : i32
    return %c0_i32, %c0_i32_0 : i32, i32
  }
  func.func @transform_8(%arg0: i32) -> (i32, i32) {
    %c0_i32 = arith.constant 0 : i32
    %c0_i32_0 = arith.constant 0 : i32
    %c0_i32_1 = arith.constant 0 : i32
    return %c0_i32, %c0_i32_0 : i32, i32
  }
  func.func @transform_9(%arg0: i32) -> (i32, i32) {
    %c0_i32 = arith.constant 0 : i32
    %c0_i32_0 = arith.constant 0 : i32
    return %arg0, %c0_i32 : i32, i32
  }
}

</mosaic_0001>

<llo_original>
// kernel: nn_classifier_forward.1
$region0: #{nn_classifier_forward.1}
  #allocation0 [shape = 'u32[]', space=smem, size = 0x4, offset = 0x4, fixed_abs, tag = 'smem constant byte address 0x4 - core index']
  #allocation1 [shape = 'u32[72,128]{1,0:T(1,128)}', space=vmem, size = 0x9000, scoped, tag = 'internal scratch']
  %s0 = inlined_call_operand.hbm [shape: f32[16,32], index: 0, kind: input, shape index: {}]
  %s1 = inlined_call_operand.hbm [shape: bf16[32,128], index: 1, kind: input, shape index: {}]
  %s2 = inlined_call_operand.vmem [shape: f32[1,128], index: 2, kind: input, shape index: {}]
  %s3 = inlined_call_operand.hbm [shape: bf16[128,128], index: 3, kind: input, shape index: {}]
  %s4 = inlined_call_operand.vmem [shape: f32[1,128], index: 4, kind: input, shape index: {}]
  %s5 = inlined_call_operand.hbm [shape: bf16[128,128], index: 5, kind: input, shape index: {}]
  %s6 = inlined_call_operand.vmem [shape: f32[1,128], index: 6, kind: input, shape index: {}]
  %s7 = inlined_call_operand.hbm [shape: bf16[128,128], index: 7, kind: input, shape index: {}]
  %s8 = inlined_call_operand.vmem [shape: f32[1,128], index: 8, kind: input, shape index: {}]
  %s9 = inlined_call_operand.vmem [shape: bf16[16,128], index: 9, kind: output, shape index: {}]
  %s10 = sld [smem:[#allocation0]]
  $region66: #{nn_classifier_forward.1} parent=0
    _
  %s12 = ssub.s32 1, %s10
  %s13 = scalar_select 0, %s12, %s10
  $region1: #{nn_classifier_forward.1} parent=0
    #allocation2 [shape = 'u8[8192]{0}', space=vmem, size = 0x2000, scoped, tag = 'input window, operand 0, single buffered']
    #allocation3 [shape = 's32[1]{0}', space=sflag, size = 0x4, scoped, tag = 'scoped memory for nn_classifier_forward.1']
    #allocation4 [shape = 'u8[8192]{0}', space=vmem, size = 0x2000, scoped, tag = 'input window, operand 1, single buffered']
    #allocation5 [shape = 's32[1]{0}', space=sflag, size = 0x4, scoped, tag = 'scoped memory for nn_classifier_forward.1']
    #allocation6 [shape = 'u8[32768]{0}', space=vmem, size = 0x8000, scoped, tag = 'input window, operand 3, single buffered']
    #allocation7 [shape = 'u8[32768]{0}', space=vmem, size = 0x8000, scoped, tag = 'input window, operand 5, single buffered']
    #allocation8 [shape = 's32[1]{0}', space=sflag, size = 0x4, scoped, tag = 'scoped memory for nn_classifier_forward.1']
    #allocation9 [shape = 'u8[32768]{0}', space=vmem, size = 0x8000, scoped, tag = 'input window, operand 7, single buffered']
    %14 = vsyncpa [#allocation3], 0
    %15 = vsyncpa [#allocation5], 0
    %16 = vsyncpa [#allocation8], 0
    // Predicated region
    $region2: #{nn_classifier_forward.1} parent=1 // pred_check
      _
    $region3: #{nn_classifier_forward.1} parent=1 // pred_check_branch
      %18 = sbr.rel (0) target = $region5
    $region4: #{nn_classifier_forward.1} parent=1 // pred_region
      %20 = vsyncadd [#allocation3], 0
      %s21 = sshll.u32 %s0, 4
      %s22 = int_to_ptr.hbm [resolvable:$true] %s21
      %s23 = sshll.u32 [#allocation2], 4
      %s24 = int_to_ptr.vmem [resolvable:$true] %s23
      %29 = dma.hbm_to_vmem [thread:$0]  %s22, 256, %s24, [#allocation3], 128, 128, 8
    $region5: #{nn_classifier_forward.1} parent=1 // pred_fallthru
      _
    // Predicated region
    $region6: #{nn_classifier_forward.1} parent=1 // pred_check
      _
    $region7: #{nn_classifier_forward.1} parent=1 // pred_check_branch
      %31 = sbr.rel (0) target = $region9
    $region8: #{nn_classifier_forward.1} parent=1 // pred_region
      %33 = vsyncadd [#allocation5], 0
      %s34 = sshll.u32 %s1, 4
      %s35 = int_to_ptr.hbm [resolvable:$true] %s34
      %s36 = sshll.u32 [#allocation4], 4
      %s37 = int_to_ptr.vmem [resolvable:$true] %s36
      %42 = dma.hbm_to_vmem [thread:$0]  %s35, 256, %s37, [#allocation5], 64, 64, 4
    $region9: #{nn_classifier_forward.1} parent=1 // pred_fallthru
      _
    // Predicated region
    $region10: #{nn_classifier_forward.1} parent=1 // pred_check
      _
    $region11: #{nn_classifier_forward.1} parent=1 // pred_check_branch
      %44 = sbr.rel (0) target = $region13
    $region12: #{nn_classifier_forward.1} parent=1 // pred_region
      _
    $region13: #{nn_classifier_forward.1} parent=1 // pred_fallthru
      _
    // Predicated region
    $region14: #{nn_classifier_forward.1} parent=1 // pred_check
      _
    $region15: #{nn_classifier_forward.1} parent=1 // pred_check_branch
      %46 = sbr.rel (0) target = $region17
    $region16: #{nn_classifier_forward.1} parent=1 // pred_region
      %48 = vsyncadd [#allocation5], 0
      %s49 = sshll.u32 %s3, 4
      %s50 = int_to_ptr.hbm [resolvable:$true] %s49
      %s51 = sshll.u32 [#allocation6], 4
      %s52 = int_to_ptr.vmem [resolvable:$true] %s51
      %57 = dma.hbm_to_vmem [thread:$0]  %s50, 1024, %s52, [#allocation5], 64, 64, 4
    $region17: #{nn_classifier_forward.1} parent=1 // pred_fallthru
      _
    // Predicated region
    $region18: #{nn_classifier_forward.1} parent=1 // pred_check
      _
    $region19: #{nn_classifier_forward.1} parent=1 // pred_check_branch
      %59 = sbr.rel (0) target = $region21
    $region20: #{nn_classifier_forward.1} parent=1 // pred_region
      _
    $region21: #{nn_classifier_forward.1} parent=1 // pred_fallthru
      _
    // Predicated region
    $region22: #{nn_classifier_forward.1} parent=1 // pred_check
      _
    $region23: #{nn_classifier_forward.1} parent=1 // pred_check_branch
      %61 = sbr.rel (0) target = $region25
    $region24: #{nn_classifier_forward.1} parent=1 // pred_region
      %63 = vsyncadd [#allocation8], 0
      %s64 = sshll.u32 %s5, 4
      %s65 = int_to_ptr.hbm [resolvable:$true] %s64
      %s66 = sshll.u32 [#allocation7], 4
      %s67 = int_to_ptr.vmem [resolvable:$true] %s66
      %72 = dma.hbm_to_vmem [thread:$0]  %s65, 1024, %s67, [#allocation8], 64, 64, 4
    $region25: #{nn_classifier_forward.1} parent=1 // pred_fallthru
      _
    // Predicated region
    $region26: #{nn_classifier_forward.1} parent=1 // pred_check
      _
    $region27: #{nn_classifier_forward.1} parent=1 // pred_check_branch
      %74 = sbr.rel (0) target = $region29
    $region28: #{nn_classifier_forward.1} parent=1 // pred_region
      _
    $region29: #{nn_classifier_forward.1} parent=1 // pred_fallthru
      _
    // Predicated region
    $region30: #{nn_classifier_forward.1} parent=1 // pred_check
      _
    $region31: #{nn_classifier_forward.1} parent=1 // pred_check_branch
      %76 = sbr.rel (0) target = $region33
    $region32: #{nn_classifier_forward.1} parent=1 // pred_region
      %78 = vsyncadd [#allocation8], 0
      %s79 = sshll.u32 %s7, 4
      %s80 = int_to_ptr.hbm [resolvable:$true] %s79
      %s81 = sshll.u32 [#allocation9], 4
      %s82 = int_to_ptr.vmem [resolvable:$true] %s81
      %87 = dma.hbm_to_vmem [thread:$0]  %s80, 1024, %s82, [#allocation8], 64, 64, 4
    $region33: #{nn_classifier_forward.1} parent=1 // pred_fallthru
      _
    // Predicated region
    $region34: #{nn_classifier_forward.1} parent=1 // pred_check
      _
    $region35: #{nn_classifier_forward.1} parent=1 // pred_check_branch
      %89 = sbr.rel (0) target = $region37
    $region36: #{nn_classifier_forward.1} parent=1 // pred_region
      _
    $region37: #{nn_classifier_forward.1} parent=1 // pred_fallthru
      _
    // Predicated region
    $region38: #{nn_classifier_forward.1} parent=1 // pred_check
      _
    $region39: #{nn_classifier_forward.1} parent=1 // pred_check_branch
      %91 = sbr.rel (0) target = $region41
    $region40: #{nn_classifier_forward.1} parent=1 // pred_region
      %93 = dma.done [#allocation3], 256
    $region41: #{nn_classifier_forward.1} parent=1 // pred_fallthru
      _
    // Predicated region
    $region42: #{nn_classifier_forward.1} parent=1 // pred_check
      _
    $region43: #{nn_classifier_forward.1} parent=1 // pred_check_branch
      %95 = sbr.rel (0) target = $region45
    $region44: #{nn_classifier_forward.1} parent=1 // pred_region
      %97 = dma.done [#allocation5], 256
    $region45: #{nn_classifier_forward.1} parent=1 // pred_fallthru
      _
    // Predicated region
    $region46: #{nn_classifier_forward.1} parent=1 // pred_check
      _
    $region47: #{nn_classifier_forward.1} parent=1 // pred_check_branch
      %99 = sbr.rel (0) target = $region49
    $region48: #{nn_classifier_forward.1} parent=1 // pred_region
      %101 = dma.done [#allocation5], 1024
    $region49: #{nn_classifier_forward.1} parent=1 // pred_fallthru
      _
    // Predicated region
    $region50: #{nn_classifier_forward.1} parent=1 // pred_check
      _
    $region51: #{nn_classifier_forward.1} parent=1 // pred_check_branch
      %103 = sbr.rel (0) target = $region53
    $region52: #{nn_classifier_forward.1} parent=1 // pred_region
      %105 = dma.done [#allocation8], 1024
    $region53: #{nn_classifier_forward.1} parent=1 // pred_fallthru
      _
    // Predicated region
    $region54: #{nn_classifier_forward.1} parent=1 // pred_check
      _
    $region55: #{nn_classifier_forward.1} parent=1 // pred_check_branch
      %107 = sbr.rel (0) target = $region57
    $region56: #{nn_classifier_forward.1} parent=1 // pred_region
      %109 = dma.done [#allocation8], 1024
    $region57: #{nn_classifier_forward.1} parent=1 // pred_fallthru
      _
    %v111 = vld [vmem:[#allocation2] sm:$0xff]
    %v112 = vld [vmem:[#allocation2 + $0x8] sm:$0xff]
    %v113 = vpack.c.bf16 %v112, %v111
    %v114 = vld [vmem:[#allocation4] sm:$0xf]
    %v115 = vld [vmem:[#allocation4 + $0x4] sm:$0xf]
    %v116 = vld [vmem:[#allocation4 + $0x8] sm:$0xf]
    %v117 = vld [vmem:[#allocation4 + $0xc] sm:$0xf]
    %v118 = vld [vmem:[%s2] sm:$0x1]
    %v120 = vperm.slane %v118, 0
    %v126 = vunpack.c.l.b16 %v114
    %v127 = vunpack.c.l.b16 %v115
    %v128 = vunpack.c.l.b16 %v116
    %v129 = vunpack.c.l.b16 %v117
    %v130 = vpack.c.b16 %v127, %v126
    %v131 = vpack.c.b16 %v129, %v128
    %vm134 = vcmask 261120
    %v136 = vsel %vm134, %v113, 0
    %138 = vmatpush.bf16.msra.mxu0 0
    %139 = vmatpush.bf16.msra.mxu0 0
    %140 = vmatpush.bf16.msra.mxu0 0
    %141 = vmatpush.bf16.msra.mxu0 0
    %142 = vmatpush.bf16.msra.mxu0 0
    %143 = vmatpush.bf16.msra.mxu0 0
    %144 = vmatpush.bf16.msra.mxu0 %v131
    %145 = vmatpush.bf16.msra.mxu0 %v130
    %146 = vmatmul.bf16.gmra.mxu0 %v136
    %v147 = vpop.f32.mrf.mxu0
    %v148 = vadd.f32 %v120, %v147
    %v149 = vpop.f32.mrf.mxu0
    %v150 = vadd.f32 %v120, %v149
    %151 = vdwg.mxu0
    %v152 = vmax.f32 %v148, 0.0
    %v153 = vmax.f32 %v150, 0.0
    %v154 = vpack.c.bf16 %v153, %v152
    %v155 = vld [vmem:[#allocation6] sm:$0xf]
    %v156 = vld [vmem:[#allocation6 + $0x4] sm:$0xf]
    %v157 = vld [vmem:[#allocation6 + $0x8] sm:$0xf]
    %v158 = vld [vmem:[#allocation6 + $0xc] sm:$0xf]
    %v159 = vld [vmem:[#allocation6 + $0x10] sm:$0xf]
    %v160 = vld [vmem:[#allocation6 + $0x14] sm:$0xf]
    %v161 = vld [vmem:[#allocation6 + $0x18] sm:$0xf]
    %v162 = vld [vmem:[#allocation6 + $0x1c] sm:$0xf]
    %v163 = vld [vmem:[#allocation6 + $0x20] sm:$0xf]
    %v164 = vld [vmem:[#allocation6 + $0x24] sm:$0xf]
    %v165 = vld [vmem:[#allocation6 + $0x28] sm:$0xf]
    %v166 = vld [vmem:[#allocation6 + $0x2c] sm:$0xf]
    %v167 = vld [vmem:[#allocation6 + $0x30] sm:$0xf]
    %v168 = vld [vmem:[#allocation6 + $0x34] sm:$0xf]
    %v169 = vld [vmem:[#allocation6 + $0x38] sm:$0xf]
    %v170 = vld [vmem:[#allocation6 + $0x3c] sm:$0xf]
    %v171 = vld [vmem:[%s4] sm:$0x1]
    %v173 = vperm.slane %v171, 0
    %v191 = vunpack.c.l.b16 %v155
    %v192 = vunpack.c.l.b16 %v156
    %v193 = vunpack.c.l.b16 %v157
    %v194 = vunpack.c.l.b16 %v158
    %v195 = vunpack.c.l.b16 %v159
    %v196 = vunpack.c.l.b16 %v160
    %v197 = vunpack.c.l.b16 %v161
    %v198 = vunpack.c.l.b16 %v162
    %v199 = vunpack.c.l.b16 %v163
    %v200 = vunpack.c.l.b16 %v164
    %v201 = vunpack.c.l.b16 %v165
    %v202 = vunpack.c.l.b16 %v166
    %v203 = vunpack.c.l.b16 %v167
    %v204 = vunpack.c.l.b16 %v168
    %v205 = vunpack.c.l.b16 %v169
    %v206 = vunpack.c.l.b16 %v170
    %v207 = vpack.c.b16 %v192, %v191
    %v208 = vpack.c.b16 %v194, %v193
    %v209 = vpack.c.b16 %v196, %v195
    %v210 = vpack.c.b16 %v198, %v197
    %v211 = vpack.c.b16 %v200, %v199
    %v212 = vpack.c.b16 %v202, %v201
    %v213 = vpack.c.b16 %v204, %v203
    %v214 = vpack.c.b16 %v206, %v205
    %223 = vmatpush.bf16.msra.mxu0 %v214
    %224 = vmatpush.bf16.msra.mxu0 %v213
    %225 = vmatpush.bf16.msra.mxu0 %v212
    %226 = vmatpush.bf16.msra.mxu0 %v211
    %227 = vmatpush.bf16.msra.mxu0 %v210
    %228 = vmatpush.bf16.msra.mxu0 %v209
    %229 = vmatpush.bf16.msra.mxu0 %v208
    %230 = vmatpush.bf16.msra.mxu0 %v207
    %231 = vmatmul.bf16.gmra.mxu0 %v154
    %v232 = vpop.f32.mrf.mxu0
    %v233 = vadd.f32 %v173, %v232
    %v234 = vpop.f32.mrf.mxu0
    %v235 = vadd.f32 %v173, %v234
    %236 = vdwg.mxu0
    %v237 = vmax.f32 %v233, 0.0
    %v238 = vmax.f32 %v235, 0.0
    %v239 = vpack.c.bf16 %v238, %v237
    %v240 = vld [vmem:[#allocation7] sm:$0xf]
    %v241 = vld [vmem:[#allocation7 + $0x4] sm:$0xf]
    %v242 = vld [vmem:[#allocation7 + $0x8] sm:$0xf]
    %v243 = vld [vmem:[#allocation7 + $0xc] sm:$0xf]
    %v244 = vld [vmem:[#allocation7 + $0x10] sm:$0xf]
    %v245 = vld [vmem:[#allocation7 + $0x14] sm:$0xf]
    %v246 = vld [vmem:[#allocation7 + $0x18] sm:$0xf]
    %v247 = vld [vmem:[#allocation7 + $0x1c] sm:$0xf]
    %v248 = vld [vmem:[#allocation7 + $0x20] sm:$0xf]
    %v249 = vld [vmem:[#allocation7 + $0x24] sm:$0xf]
    %v250 = vld [vmem:[#allocation7 + $0x28] sm:$0xf]
    %v251 = vld [vmem:[#allocation7 + $0x2c] sm:$0xf]
    %v252 = vld [vmem:[#allocation7 + $0x30] sm:$0xf]
    %v253 = vld [vmem:[#allocation7 + $0x34] sm:$0xf]
    %v254 = vld [vmem:[#allocation7 + $0x38] sm:$0xf]
    %v255 = vld [vmem:[#allocation7 + $0x3c] sm:$0xf]
    %v256 = vld [vmem:[%s6] sm:$0x1]
    %v258 = vperm.slane %v256, 0
    %v276 = vunpack.c.l.b16 %v240
    %v277 = vunpack.c.l.b16 %v241
    %v278 = vunpack.c.l.b16 %v242
    %v279 = vunpack.c.l.b16 %v243
    %v280 = vunpack.c.l.b16 %v244
    %v281 = vunpack.c.l.b16 %v245
    %v282 = vunpack.c.l.b16 %v246
    %v283 = vunpack.c.l.b16 %v247
    %v284 = vunpack.c.l.b16 %v248
    %v285 = vunpack.c.l.b16 %v249
    %v286 = vunpack.c.l.b16 %v250
    %v287 = vunpack.c.l.b16 %v251
    %v288 = vunpack.c.l.b16 %v252
    %v289 = vunpack.c.l.b16 %v253
    %v290 = vunpack.c.l.b16 %v254
    %v291 = vunpack.c.l.b16 %v255
    %v292 = vpack.c.b16 %v277, %v276
    %v293 = vpack.c.b16 %v279, %v278
    %v294 = vpack.c.b16 %v281, %v280
    %v295 = vpack.c.b16 %v283, %v282
    %v296 = vpack.c.b16 %v285, %v284
    %v297 = vpack.c.b16 %v287, %v286
    %v298 = vpack.c.b16 %v289, %v288
    %v299 = vpack.c.b16 %v291, %v290
    %308 = vmatpush.bf16.msra.mxu0 %v299
    %309 = vmatpush.bf16.msra.mxu0 %v298
    %310 = vmatpush.bf16.msra.mxu0 %v297
    %311 = vmatpush.bf16.msra.mxu0 %v296
    %312 = vmatpush.bf16.msra.mxu0 %v295
    %313 = vmatpush.bf16.msra.mxu0 %v294
    %314 = vmatpush.bf16.msra.mxu0 %v293
    %315 = vmatpush.bf16.msra.mxu0 %v292
    %316 = vmatmul.bf16.gmra.mxu0 %v239
    %v317 = vpop.f32.mrf.mxu0
    %v318 = vadd.f32 %v258, %v317
    %v319 = vpop.f32.mrf.mxu0
    %v320 = vadd.f32 %v258, %v319
    %321 = vdwg.mxu0
    %v322 = vmax.f32 %v318, 0.0
    %v323 = vmax.f32 %v320, 0.0
    %v324 = vpack.c.bf16 %v323, %v322
    %v325 = vld [vmem:[#allocation9] sm:$0xf]
    %v326 = vld [vmem:[#allocation9 + $0x4] sm:$0xf]
    %v327 = vld [vmem:[#allocation9 + $0x8] sm:$0xf]
    %v328 = vld [vmem:[#allocation9 + $0xc] sm:$0xf]
    %v329 = vld [vmem:[#allocation9 + $0x10] sm:$0xf]
    %v330 = vld [vmem:[#allocation9 + $0x14] sm:$0xf]
    %v331 = vld [vmem:[#allocation9 + $0x18] sm:$0xf]
    %v332 = vld [vmem:[#allocation9 + $0x1c] sm:$0xf]
    %v333 = vld [vmem:[#allocation9 + $0x20] sm:$0xf]
    %v334 = vld [vmem:[#allocation9 + $0x24] sm:$0xf]
    %v335 = vld [vmem:[#allocation9 + $0x28] sm:$0xf]
    %v336 = vld [vmem:[#allocation9 + $0x2c] sm:$0xf]
    %v337 = vld [vmem:[#allocation9 + $0x30] sm:$0xf]
    %v338 = vld [vmem:[#allocation9 + $0x34] sm:$0xf]
    %v339 = vld [vmem:[#allocation9 + $0x38] sm:$0xf]
    %v340 = vld [vmem:[#allocation9 + $0x3c] sm:$0xf]
    %v341 = vld [vmem:[%s8] sm:$0x1]
    %v343 = vperm.slane %v341, 0
    %v361 = vunpack.c.l.b16 %v325
    %v362 = vunpack.c.l.b16 %v326
    %v363 = vunpack.c.l.b16 %v327
    %v364 = vunpack.c.l.b16 %v328
    %v365 = vunpack.c.l.b16 %v329
    %v366 = vunpack.c.l.b16 %v330
    %v367 = vunpack.c.l.b16 %v331
    %v368 = vunpack.c.l.b16 %v332
    %v369 = vunpack.c.l.b16 %v333
    %v370 = vunpack.c.l.b16 %v334
    %v371 = vunpack.c.l.b16 %v335
    %v372 = vunpack.c.l.b16 %v336
    %v373 = vunpack.c.l.b16 %v337
    %v374 = vunpack.c.l.b16 %v338
    %v375 = vunpack.c.l.b16 %v339
    %v376 = vunpack.c.l.b16 %v340
    %v377 = vpack.c.b16 %v362, %v361
    %v378 = vpack.c.b16 %v364, %v363
    %v379 = vpack.c.b16 %v366, %v365
    %v380 = vpack.c.b16 %v368, %v367
    %v381 = vpack.c.b16 %v370, %v369
    %v382 = vpack.c.b16 %v372, %v371
    %v383 = vpack.c.b16 %v374, %v373
    %v384 = vpack.c.b16 %v376, %v375
    %393 = vmatpush.bf16.msra.mxu0 %v384
    %394 = vmatpush.bf16.msra.mxu0 %v383
    %395 = vmatpush.bf16.msra.mxu0 %v382
    %396 = vmatpush.bf16.msra.mxu0 %v381
    %397 = vmatpush.bf16.msra.mxu0 %v380
    %398 = vmatpush.bf16.msra.mxu0 %v379
    %399 = vmatpush.bf16.msra.mxu0 %v378
    %400 = vmatpush.bf16.msra.mxu0 %v377
    %401 = vmatmul.bf16.gmra.mxu0 %v324
    %v402 = vpop.f32.mrf.mxu0
    %v403 = vadd.f32 %v343, %v402
    %v404 = vpop.f32.mrf.mxu0
    %v405 = vadd.f32 %v343, %v404
    %406 = vdwg.mxu0
    %407 = vmax.xlane.f32.xlu0 %v403
    %v408 = vpop.xlane.xlu0 %407
    %409 = vmax.xlane.f32.xlu0 %v405
    %v410 = vpop.xlane.xlu0 %409
    %v411 = vsub.f32 %v403, %v408
    %v412 = vsub.f32 %v405, %v410
    %v413 = vmul.f32 %v411, 1.442695
    %v414 = vpow.pop %v413
    %v415 = vmul.f32 %v412, 1.442695
    %v416 = vpow.pop %v415
    %417 = vadd.xlane.f32.xlu0 %v414
    %v418 = vpop.xlane.xlu0 %417
    %419 = vadd.xlane.f32.xlu0 %v416
    %v420 = vpop.xlane.xlu0 %419
    %v421 = vrcp.pop %v418
    %v422 = vrcp.pop %v420
    %v423 = vmul.f32 %v418, %v421
    %v424 = vmul.f32 %v420, %v422
    %v425 = vsub.f32 2.0, %v423
    %v426 = vsub.f32 2.0, %v424
    %v427 = vmul.f32 %v421, %v425
    %v428 = vmul.f32 %v422, %v426
    %v429 = vmul.f32 %v414, %v427
    %v430 = vmul.f32 %v416, %v428
    %v431 = vpack.c.bf16 %v429, %v429
    %v432 = vpack.c.bf16 %v430, %v430
    %433 = vst [vmem:[%s9] sm:$0xf] %v431
    %434 = vst [vmem:[%s9 + $0x4] sm:$0xf] %v432
    // Predicated region
    $region58: #{nn_classifier_forward.1} parent=1 // pred_check
      _
    $region59: #{nn_classifier_forward.1} parent=1 // pred_check_branch
      %436 = sbr.rel (0) target = $region61
    $region60: #{nn_classifier_forward.1} parent=1 // pred_region
      _
    $region61: #{nn_classifier_forward.1} parent=1 // pred_fallthru
      _
    // Predicated region
    $region62: #{nn_classifier_forward.1} parent=1 // pred_check
      _
    $region63: #{nn_classifier_forward.1} parent=1 // pred_check_branch
      %438 = sbr.rel (0) target = $region65
    $region64: #{nn_classifier_forward.1} parent=1 // pred_region
      _
    $region65: #{nn_classifier_forward.1} parent=1 // pred_fallthru
      _
    %439 = vsyncpa [#allocation3], 1
    %440 = vsyncpa [#allocation5], 1
    %441 = vsyncpa [#allocation8], 1

</llo_original>
